<compile_context>
chip_gen: v7x
topology: tpu7x:2x2x1
jax: 0.10.0
libtpu: 0.0.40
codegen_flags: <defaults>
</compile_context>

<pallas_src>
import jax
import jax.numpy as jnp
from jax.experimental import pallas as pl
from jax.experimental.pallas import tpu as pltpu

IN_DIM = 33        # model input features
HIDDEN = 128       # hidden width (also padded feature width inside kernel)
OUT_DIM = 4        # model output features
NUM_LAYERS = 5
ROW_ALIGN = 16     # batch-tile alignment (bf16 sublane tile friendly)


def actor_high_kernel(x_ref, w_ref, b_ref, o_ref, xp_ref):
    # x_ref : (tm, 33)        bf16   unpadded input tile
    # w_ref : (5, 128, 128)   bf16   packed weights (VMEM-resident; w0 rows
    #                                33..127 and w4 cols 4..127 are zero)
    # b_ref : (8, 128)        f32    packed biases (rows 0..4 used)
    # o_ref : (tm, 4)         f32    compact output tile
    # xp_ref: (tm, 128)       bf16   scratch: lane-padded activations

    # Zero-pad the 33-wide input to 128 lanes via VMEM scratch (masked stores
    # are always supported; padded lanes must be 0, not garbage, to avoid
    # NaN * 0 issues even though w0's extra rows are zero).
    xp_ref[...] = jnp.zeros_like(xp_ref)
    xp_ref[:, :IN_DIM] = x_ref[...]
    h = xp_ref[...]                                        # (tm, 128) bf16

    out = None
    for layer in range(NUM_LAYERS):                        # static unroll
        y = jnp.dot(h, w_ref[layer],                       # bf16 MXU, f32 acc
                    preferred_element_type=jnp.float32) + b_ref[layer]
        if layer < NUM_LAYERS - 1:
            h = jnp.maximum(y, 0.0).astype(jnp.bfloat16)   # ReLU in f32
        else:
            out = y                                        # (tm, 128) f32

    o_ref[...] = out[:, :OUT_DIM]                          # compact writeback


def pack_params(params, weights_dtype=jnp.bfloat16):
    """params: list of (W:(in,out) f32, b:(out,) f32) -> packed (W, b) slabs."""
    w_packed = jnp.zeros((NUM_LAYERS, HIDDEN, HIDDEN), jnp.float32)
    b_packed = jnp.zeros((8, HIDDEN), jnp.float32)
    for i, (w, b) in enumerate(params):
        din, dout = w.shape
        w_packed = w_packed.at[i, :din, :dout].set(w)
        b_packed = b_packed.at[i, :dout].set(b.reshape(-1))
    return w_packed.astype(weights_dtype), b_packed


def _round_up(v, m):
    return ((v + m - 1) // m) * m


def actor_high_forward(x, w_packed, b_packed, *, block_rows=512):
    """x: (B, 33) float32. Returns (B, 4) float32."""
    B, in_dim = x.shape
    assert in_dim == IN_DIM, in_dim

    if B <= block_rows:
        # Moderate batches: use >=2 blocks so v7x megacore can shard the
        # parallel axis; tiny batches use a single minimal tile.
        if B >= 4 * ROW_ALIGN:
            n_blocks = 2
        else:
            n_blocks = 1
    else:
        n_blocks = -(-B // block_rows)
    tm = _round_up(-(-B // n_blocks), ROW_ALIGN)   # minimize batch padding
    b_pad = tm * n_blocks

    x_bf16 = x.astype(jnp.bfloat16)
    if b_pad != B:
        x_bf16 = jnp.pad(x_bf16, ((0, b_pad - B), (0, 0)))

    out = pl.pallas_call(
        actor_high_kernel,
        out_shape=jax.ShapeDtypeStruct((b_pad, OUT_DIM), jnp.float32),
        grid_spec=pltpu.PrefetchScalarGridSpec(
            num_scalar_prefetch=0,
            grid=(n_blocks,),
            in_specs=[
                pl.BlockSpec((tm, IN_DIM), lambda i: (i, 0)),        # x tile
                pl.BlockSpec((NUM_LAYERS, HIDDEN, HIDDEN),
                             lambda i: (0, 0, 0)),                   # weights
                pl.BlockSpec((8, HIDDEN), lambda i: (0, 0)),         # biases
            ],
            out_specs=pl.BlockSpec((tm, OUT_DIM), lambda i: (i, 0)),
            scratch_shapes=[pltpu.VMEM((tm, HIDDEN), jnp.bfloat16)],
        ),
        compiler_params=pltpu.CompilerParams(
            dimension_semantics=("parallel",)),
    )(x_bf16, w_packed, b_packed)

    return out[:B]


def init_params(key):
    """PyTorch-Linear-like init; W stored transposed as (in, out), b as (out,)."""
    dims = [(IN_DIM, 128), (128, 128), (128, 128), (128, 128), (128, OUT_DIM)]
    params = []
    for din, dout in dims:
        kw, kb, key = jax.random.split(key, 3)
        bound = 1.0 / jnp.sqrt(din)
        w = jax.random.uniform(kw, (din, dout), jnp.float32, -bound, bound)
        b = jax.random.uniform(kb, (dout,), jnp.float32, -bound, bound)
        params.append((w, b))
    return params


def reference_forward_bf16(x, params):
    """Same numerics as the kernel: bf16 matmul operands, f32 accumulate."""
    h = x.astype(jnp.float32)
    for i, (w, b) in enumerate(params):
        y = jnp.dot(h.astype(jnp.bfloat16), w.astype(jnp.bfloat16),
                    preferred_element_type=jnp.float32) + b
        h = jnp.maximum(y, 0.0) if i < len(params) - 1 else y
    return h


def reference_forward_f32(x, params):
    """Pure f32 reference of the original PyTorch module."""
    h = x
    for i, (w, b) in enumerate(params):
        h = h @ w + b
        if i < len(params) - 1:
            h = jnp.maximum(h, 0.0)
    return h


if __name__ == "__main__":
    key = jax.random.PRNGKey(0)
    kx, kp = jax.random.split(key)

    batch = 8
    x = jax.random.normal(kx, (batch, IN_DIM), jnp.float32)
    params = init_params(kp)
    w_packed, b_packed = pack_params(params)

    out = actor_high_forward(x, w_packed, b_packed)
    out = jax.block_until_ready(out)

    assert out.shape == (batch, OUT_DIM), out.shape

    # Exact-semantics check (bf16 matmul operands, f32 accumulation).
    ref_bf16 = reference_forward_bf16(x, params)
    assert jnp.allclose(out, ref_bf16, atol=2e-3, rtol=2e-3), (
        float(jnp.max(jnp.abs(out - ref_bf16))))

    # Sanity check against the full-f32 PyTorch semantics (bf16 rounding slack).
    ref_f32 = reference_forward_f32(x, params)
    assert jnp.allclose(out, ref_f32, atol=5e-2, rtol=5e-2), (
        float(jnp.max(jnp.abs(out - ref_f32))))

    print("KERNEL_OK")
</pallas_src>

<mosaic_0001>
module attributes {stable_mosaic.version = 11 : i64} {
  func.func @actor_high_kernel(%arg0: i32, %arg1: memref<16x33xbf16, #tpu.memory_space<vmem>>, %arg2: memref<5x128x128xbf16, #tpu.memory_space<vmem>>, %arg3: memref<8x128xf32, #tpu.memory_space<vmem>>, %arg4: memref<16x4xf32, #tpu.memory_space<vmem>>, %arg5: memref<16x128xbf16, #tpu.memory_space<vmem>>) attributes {dimension_semantics = [#tpu.dimension_semantics<parallel>], iteration_bounds = array<i64: 1>, scalar_prefetch = 0 : i64, scratch_operands = 1 : i64, tpu.core_type = #tpu.core_type<tc>, window_params = [{transform_indices = @transform_0, window_bounds = array<i64: 16, 33>}, {pipeline_mode = #tpu.pipeline_mode<synchronous>, transform_indices = @transform_1, window_bounds = array<i64: 5, 128, 128>}, {pipeline_mode = #tpu.pipeline_mode<synchronous>, transform_indices = @transform_2, window_bounds = array<i64: 8, 128>}, {transform_indices = @transform_3, window_bounds = array<i64: 16, 4>}]} {
    %cst = arith.constant 0.000000e+00 : bf16
    %0 = vector.broadcast %cst : bf16 to vector<16x128xbf16>
    %c0 = arith.constant 0 : index
    %c0_0 = arith.constant 0 : index
    %1 = vector.load %arg5[%c0, %c0_0] : memref<16x128xbf16, #tpu.memory_space<vmem>>, vector<16x128xbf16>
    tpu.vector_store %arg5[%c0, %c0_0], %0 {strides = array<i32>} : memref<16x128xbf16, #tpu.memory_space<vmem>>, vector<16x128xbf16>,
    %c0_1 = arith.constant 0 : index
    %c0_2 = arith.constant 0 : index
    %2 = vector.load %arg1[%c0_1, %c0_2] : memref<16x33xbf16, #tpu.memory_space<vmem>>, vector<16x33xbf16>
    %c0_3 = arith.constant 0 : index
    %c0_4 = arith.constant 0 : index
    %3 = vector.load %arg5[%c0_3, %c0_4] : memref<16x128xbf16, #tpu.memory_space<vmem>>, vector<16x33xbf16>
    tpu.vector_store %arg5[%c0_3, %c0_4], %2 {strides = array<i32>} : memref<16x128xbf16, #tpu.memory_space<vmem>>, vector<16x33xbf16>,
    %c0_5 = arith.constant 0 : index
    %c0_6 = arith.constant 0 : index
    %4 = vector.load %arg5[%c0_5, %c0_6] : memref<16x128xbf16, #tpu.memory_space<vmem>>, vector<16x128xbf16>
    %c0_7 = arith.constant 0 : index
    %c0_8 = arith.constant 0 : index
    %c0_9 = arith.constant 0 : index
    %5 = vector.load %arg2[%c0_7, %c0_8, %c0_9] : memref<5x128x128xbf16, #tpu.memory_space<vmem>>, vector<1x128x128xbf16>
    %6 = vector.shape_cast %5 : vector<1x128x128xbf16> to vector<128x128xbf16>
    %cst_10 = arith.constant dense<0.000000e+00> : vector<16x128xf32>
    %7 = tpu.matmul %4, %6, %cst_10 {dimension_numbers = #tpu.dot_dimension_numbers<[1], [0], [0], [1], [0, 0, 1, 1], [], []>} : vector<16x128xbf16>, vector<128x128xbf16>, vector<16x128xf32> -> vector<16x128xf32>
    %c0_11 = arith.constant 0 : index
    %c0_12 = arith.constant 0 : index
    %8 = vector.load %arg3[%c0_11, %c0_12] : memref<8x128xf32, #tpu.memory_space<vmem>>, vector<1x128xf32>
    %9 = vector.shape_cast %8 : vector<1x128xf32> to vector<128xf32>
    %10 = vector.shape_cast %9 : vector<128xf32> to vector<1x128xf32>
    %11 = vector.broadcast %10 : vector<1x128xf32> to vector<16x128xf32>
    %12 = arith.addf %7, %11 : vector<16x128xf32>
    %cst_13 = arith.constant 0.000000e+00 : f32
    %13 = vector.broadcast %cst_13 : f32 to vector<16x128xf32>
    %14 = arith.maximumf %12, %13 : vector<16x128xf32>
    %15 = arith.truncf %14 : vector<16x128xf32> to vector<16x128xbf16>
    %c1 = arith.constant 1 : index
    %c0_14 = arith.constant 0 : index
    %c0_15 = arith.constant 0 : index
    %16 = vector.load %arg2[%c1, %c0_14, %c0_15] : memref<5x128x128xbf16, #tpu.memory_space<vmem>>, vector<1x128x128xbf16>
    %17 = vector.shape_cast %16 : vector<1x128x128xbf16> to vector<128x128xbf16>
    %cst_16 = arith.constant dense<0.000000e+00> : vector<16x128xf32>
    %18 = tpu.matmul %15, %17, %cst_16 {dimension_numbers = #tpu.dot_dimension_numbers<[1], [0], [0], [1], [0, 0, 1, 1], [], []>} : vector<16x128xbf16>, vector<128x128xbf16>, vector<16x128xf32> -> vector<16x128xf32>
    %c1_17 = arith.constant 1 : index
    %c0_18 = arith.constant 0 : index
    %19 = vector.load %arg3[%c1_17, %c0_18] : memref<8x128xf32, #tpu.memory_space<vmem>>, vector<1x128xf32>
    %20 = vector.shape_cast %19 : vector<1x128xf32> to vector<128xf32>
    %21 = vector.shape_cast %20 : vector<128xf32> to vector<1x128xf32>
    %22 = vector.broadcast %21 : vector<1x128xf32> to vector<16x128xf32>
    %23 = arith.addf %18, %22 : vector<16x128xf32>
    %cst_19 = arith.constant 0.000000e+00 : f32
    %24 = vector.broadcast %cst_19 : f32 to vector<16x128xf32>
    %25 = arith.maximumf %23, %24 : vector<16x128xf32>
    %26 = arith.truncf %25 : vector<16x128xf32> to vector<16x128xbf16>
    %c2 = arith.constant 2 : index
    %c0_20 = arith.constant 0 : index
    %c0_21 = arith.constant 0 : index
    %27 = vector.load %arg2[%c2, %c0_20, %c0_21] : memref<5x128x128xbf16, #tpu.memory_space<vmem>>, vector<1x128x128xbf16>
    %28 = vector.shape_cast %27 : vector<1x128x128xbf16> to vector<128x128xbf16>
    %cst_22 = arith.constant dense<0.000000e+00> : vector<16x128xf32>
    %29 = tpu.matmul %26, %28, %cst_22 {dimension_numbers = #tpu.dot_dimension_numbers<[1], [0], [0], [1], [0, 0, 1, 1], [], []>} : vector<16x128xbf16>, vector<128x128xbf16>, vector<16x128xf32> -> vector<16x128xf32>
    %c2_23 = arith.constant 2 : index
    %c0_24 = arith.constant 0 : index
    %30 = vector.load %arg3[%c2_23, %c0_24] : memref<8x128xf32, #tpu.memory_space<vmem>>, vector<1x128xf32>
    %31 = vector.shape_cast %30 : vector<1x128xf32> to vector<128xf32>
    %32 = vector.shape_cast %31 : vector<128xf32> to vector<1x128xf32>
    %33 = vector.broadcast %32 : vector<1x128xf32> to vector<16x128xf32>
    %34 = arith.addf %29, %33 : vector<16x128xf32>
    %cst_25 = arith.constant 0.000000e+00 : f32
    %35 = vector.broadcast %cst_25 : f32 to vector<16x128xf32>
    %36 = arith.maximumf %34, %35 : vector<16x128xf32>
    %37 = arith.truncf %36 : vector<16x128xf32> to vector<16x128xbf16>
    %c3 = arith.constant 3 : index
    %c0_26 = arith.constant 0 : index
    %c0_27 = arith.constant 0 : index
    %38 = vector.load %arg2[%c3, %c0_26, %c0_27] : memref<5x128x128xbf16, #tpu.memory_space<vmem>>, vector<1x128x128xbf16>
    %39 = vector.shape_cast %38 : vector<1x128x128xbf16> to vector<128x128xbf16>
    %cst_28 = arith.constant dense<0.000000e+00> : vector<16x128xf32>
    %40 = tpu.matmul %37, %39, %cst_28 {dimension_numbers = #tpu.dot_dimension_numbers<[1], [0], [0], [1], [0, 0, 1, 1], [], []>} : vector<16x128xbf16>, vector<128x128xbf16>, vector<16x128xf32> -> vector<16x128xf32>
    %c3_29 = arith.constant 3 : index
    %c0_30 = arith.constant 0 : index
    %41 = vector.load %arg3[%c3_29, %c0_30] : memref<8x128xf32, #tpu.memory_space<vmem>>, vector<1x128xf32>
    %42 = vector.shape_cast %41 : vector<1x128xf32> to vector<128xf32>
    %43 = vector.shape_cast %42 : vector<128xf32> to vector<1x128xf32>
    %44 = vector.broadcast %43 : vector<1x128xf32> to vector<16x128xf32>
    %45 = arith.addf %40, %44 : vector<16x128xf32>
    %cst_31 = arith.constant 0.000000e+00 : f32
    %46 = vector.broadcast %cst_31 : f32 to vector<16x128xf32>
    %47 = arith.maximumf %45, %46 : vector<16x128xf32>
    %48 = arith.truncf %47 : vector<16x128xf32> to vector<16x128xbf16>
    %c4 = arith.constant 4 : index
    %c0_32 = arith.constant 0 : index
    %c0_33 = arith.constant 0 : index
    %49 = vector.load %arg2[%c4, %c0_32, %c0_33] : memref<5x128x128xbf16, #tpu.memory_space<vmem>>, vector<1x128x128xbf16>
    %50 = vector.shape_cast %49 : vector<1x128x128xbf16> to vector<128x128xbf16>
    %cst_34 = arith.constant dense<0.000000e+00> : vector<16x128xf32>
    %51 = tpu.matmul %48, %50, %cst_34 {dimension_numbers = #tpu.dot_dimension_numbers<[1], [0], [0], [1], [0, 0, 1, 1], [], []>} : vector<16x128xbf16>, vector<128x128xbf16>, vector<16x128xf32> -> vector<16x128xf32>
    %c4_35 = arith.constant 4 : index
    %c0_36 = arith.constant 0 : index
    %52 = vector.load %arg3[%c4_35, %c0_36] : memref<8x128xf32, #tpu.memory_space<vmem>>, vector<1x128xf32>
    %53 = vector.shape_cast %52 : vector<1x128xf32> to vector<128xf32>
    %54 = vector.shape_cast %53 : vector<128xf32> to vector<1x128xf32>
    %55 = vector.broadcast %54 : vector<1x128xf32> to vector<16x128xf32>
    %56 = arith.addf %51, %55 : vector<16x128xf32>
    %57 = vector.extract_strided_slice %56 {offsets = [0, 0], sizes = [16, 4], strides = [1, 1]} : vector<16x128xf32> to vector<16x4xf32>
    %c0_37 = arith.constant 0 : index
    %c0_38 = arith.constant 0 : index
    %58 = vector.load %arg4[%c0_37, %c0_38] : memref<16x4xf32, #tpu.memory_space<vmem>>, vector<16x4xf32>
    tpu.vector_store %arg4[%c0_37, %c0_38], %57 {strides = array<i32>} : memref<16x4xf32, #tpu.memory_space<vmem>>, vector<16x4xf32>,
    return
  }
  func.func @transform_0(%arg0: i32) -> (i32, i32) {
    %c0_i32 = arith.constant 0 : i32
    %c0_i32_0 = arith.constant 0 : i32
    return %arg0, %c0_i32 : i32, i32
  }
  func.func @transform_1(%arg0: i32) -> (i32, i32, i32) {
    %c0_i32 = arith.constant 0 : i32
    %c0_i32_0 = arith.constant 0 : i32
    %c0_i32_1 = arith.constant 0 : i32
    %c0_i32_2 = arith.constant 0 : i32
    return %c0_i32, %c0_i32_0, %c0_i32_1 : i32, i32, i32
  }
  func.func @transform_2(%arg0: i32) -> (i32, i32) {
    %c0_i32 = arith.constant 0 : i32
    %c0_i32_0 = arith.constant 0 : i32
    %c0_i32_1 = arith.constant 0 : i32
    return %c0_i32, %c0_i32_0 : i32, i32
  }
  func.func @transform_3(%arg0: i32) -> (i32, i32) {
    %c0_i32 = arith.constant 0 : i32
    %c0_i32_0 = arith.constant 0 : i32
    return %arg0, %c0_i32 : i32, i32
  }
}

</mosaic_0001>

<llo_original>
// kernel: tpu_custom_call.1
$region0: #{tpu_custom_call.1}
  #allocation0 [shape = 'u32[]', space=smem, size = 0x4, offset = 0x4, fixed_abs, tag = 'smem constant byte address 0x4 - core index']
  #allocation1 [shape = 'u32[144,128]{1,0:T(1,128)}', space=vmem, size = 0x12000, scoped, tag = 'internal scratch']
  #allocation2 [shape = 'bf16[16,128]{1,0:T(16,128)(2,1)}', space=vmem, size = 0x1000, scoped, tag = 'scratch operand']
  %s0 = inlined_call_operand.hbm [shape: bf16[16,33], index: 0, kind: input, shape index: {}]
  %s1 = inlined_call_operand.hbm [shape: bf16[5,128,128], index: 1, kind: input, shape index: {}]
  %s2 = inlined_call_operand.hbm [shape: f32[8,128], index: 2, kind: input, shape index: {}]
  %s3 = inlined_call_operand.vmem [shape: f32[16,4], index: 3, kind: output, shape index: {}]
  %s4 = sld [smem:[#allocation0]]
  $region34: #{tpu_custom_call.1} parent=0
    _
  %s6 = ssub.s32 1, %s4
  %s7 = scalar_select 0, %s6, %s4
  $region1: #{tpu_custom_call.1} parent=0
    #allocation3 [shape = 'u8[4096]{0}', space=vmem, size = 0x1000, scoped, tag = 'input window, operand 0, single buffered']
    #allocation4 [shape = 's32[1]{0}', space=sflag, size = 0x4, scoped, tag = 'scoped memory for tpu_custom_call.1']
    #allocation5 [shape = 'u8[163840]{0}', space=vmem, size = 0x28000, scoped, tag = 'input window, operand 1, single buffered']
    #allocation6 [shape = 's32[1]{0}', space=sflag, size = 0x4, scoped, tag = 'scoped memory for tpu_custom_call.1']
    #allocation7 [shape = 'u8[4096]{0}', space=vmem, size = 0x1000, scoped, tag = 'input window, operand 2, single buffered']
    %8 = vsyncpa [#allocation4], 0
    %9 = vsyncpa [#allocation6], 0
    // Predicated region
    $region2: #{tpu_custom_call.1} parent=1 // pred_check
      _
    $region3: #{tpu_custom_call.1} parent=1 // pred_check_branch
      %11 = sbr.rel (0) target = $region5
    $region4: #{tpu_custom_call.1} parent=1 // pred_region
      %s13 = ssub.s32 128, 128
      %14 = vsyncadd [#allocation4], %s13
      %s15 = sshll.u32 [#allocation3], 4
      %s16 = int_to_ptr.vmem [resolvable:$true] %s15
      %21 = dma.hbm_to_vmem [thread:$0]  %s0, 128, %s16, [#allocation4], 64, 64, 4
    $region5: #{tpu_custom_call.1} parent=1 // pred_fallthru
      _
    // Predicated region
    $region6: #{tpu_custom_call.1} parent=1 // pred_check
      _
    $region7: #{tpu_custom_call.1} parent=1 // pred_check_branch
      %23 = sbr.rel (0) target = $region9
    $region8: #{tpu_custom_call.1} parent=1 // pred_region
      %s25 = ssub.s32 5120, 5120
      %26 = vsyncadd [#allocation6], %s25
      %s27 = sshll.u32 [#allocation5], 4
      %s28 = int_to_ptr.vmem [resolvable:$true] %s27
      %33 = dma.hbm_to_vmem [thread:$0]  %s1, 5120, %s28, [#allocation6], 64, 64, 4
    $region9: #{tpu_custom_call.1} parent=1 // pred_fallthru
      _
    // Predicated region
    $region10: #{tpu_custom_call.1} parent=1 // pred_check
      _
    $region11: #{tpu_custom_call.1} parent=1 // pred_check_branch
      %35 = sbr.rel (0) target = $region13
    $region12: #{tpu_custom_call.1} parent=1 // pred_region
      %s37 = ssub.s32 128, 128
      %38 = vsyncadd [#allocation6], %s37
      %s40 = sshll.u32 [#allocation7], 4
      %s41 = int_to_ptr.vmem [resolvable:$true] %s40
      %43 = dma.hbm_to_vmem [thread:$0]  %s2, 128, %s41, [#allocation6]
    $region13: #{tpu_custom_call.1} parent=1 // pred_fallthru
      _
    // Predicated region
    $region14: #{tpu_custom_call.1} parent=1 // pred_check
      _
    $region15: #{tpu_custom_call.1} parent=1 // pred_check_branch
      %45 = sbr.rel (0) target = $region17
    $region16: #{tpu_custom_call.1} parent=1 // pred_region
      %46 = dma.done [#allocation4], 128
    $region17: #{tpu_custom_call.1} parent=1 // pred_fallthru
      _
    // Predicated region
    $region18: #{tpu_custom_call.1} parent=1 // pred_check
      _
    $region19: #{tpu_custom_call.1} parent=1 // pred_check_branch
      %48 = sbr.rel (0) target = $region21
    $region20: #{tpu_custom_call.1} parent=1 // pred_region
      %49 = dma.done [#allocation6], 5120
    $region21: #{tpu_custom_call.1} parent=1 // pred_fallthru
      _
    // Predicated region
    $region22: #{tpu_custom_call.1} parent=1 // pred_check
      _
    $region23: #{tpu_custom_call.1} parent=1 // pred_check_branch
      %51 = sbr.rel (0) target = $region25
    $region24: #{tpu_custom_call.1} parent=1 // pred_region
      %52 = dma.done [#allocation6], 128
    $region25: #{tpu_custom_call.1} parent=1 // pred_fallthru
      _
    %54 = vst [vmem:[#allocation2] sm:$0xff] 0
    %v55 = vld [vmem:[#allocation3] sm:$0xf]
    %v56 = vld [vmem:[#allocation3 + $0x4] sm:$0xf]
    %v59 = vunpack.c.l.b16 %v55
    %v60 = vunpack.c.l.b16 %v56
    %v61 = vpack.c.b16 %v60, %v59
    %vm63 = vcmask 269312
    %64 = vst.msk [vmem:[#allocation2] sm:$0xff] %vm63, %v61
    %v65 = vld [vmem:[#allocation2] sm:$0xff]
    %v66 = vld [vmem:[#allocation5] sm:$0xf]
    %v67 = vld [vmem:[#allocation5 + $0x4] sm:$0xf]
    %v68 = vld [vmem:[#allocation5 + $0x8] sm:$0xf]
    %v69 = vld [vmem:[#allocation5 + $0xc] sm:$0xf]
    %v70 = vld [vmem:[#allocation5 + $0x10] sm:$0xf]
    %v71 = vld [vmem:[#allocation5 + $0x14] sm:$0xf]
    %v72 = vld [vmem:[#allocation5 + $0x18] sm:$0xf]
    %v73 = vld [vmem:[#allocation5 + $0x1c] sm:$0xf]
    %v74 = vld [vmem:[#allocation5 + $0x20] sm:$0xf]
    %v75 = vld [vmem:[#allocation5 + $0x24] sm:$0xf]
    %v76 = vld [vmem:[#allocation5 + $0x28] sm:$0xf]
    %v77 = vld [vmem:[#allocation5 + $0x2c] sm:$0xf]
    %v78 = vld [vmem:[#allocation5 + $0x30] sm:$0xf]
    %v79 = vld [vmem:[#allocation5 + $0x34] sm:$0xf]
    %v80 = vld [vmem:[#allocation5 + $0x38] sm:$0xf]
    %v81 = vld [vmem:[#allocation5 + $0x3c] sm:$0xf]
    %v82 = vld [vmem:[#allocation7] sm:$0x1]
    %v83 = vlaneseq
    %v84 = vshrl.u32 %v83, 7
    %v85 = vsub.s32 0, %v84
    %v86 = vrot.slane %v82, %v85
    %v103 = vunpack.c.l.b16 %v66
    %v104 = vunpack.c.l.b16 %v67
    %v105 = vunpack.c.l.b16 %v68
    %v106 = vunpack.c.l.b16 %v69
    %v107 = vunpack.c.l.b16 %v70
    %v108 = vunpack.c.l.b16 %v71
    %v109 = vunpack.c.l.b16 %v72
    %v110 = vunpack.c.l.b16 %v73
    %v111 = vunpack.c.l.b16 %v74
    %v112 = vunpack.c.l.b16 %v75
    %v113 = vunpack.c.l.b16 %v76
    %v114 = vunpack.c.l.b16 %v77
    %v115 = vunpack.c.l.b16 %v78
    %v116 = vunpack.c.l.b16 %v79
    %v117 = vunpack.c.l.b16 %v80
    %v118 = vunpack.c.l.b16 %v81
    %v119 = vpack.c.b16 %v104, %v103
    %v120 = vpack.c.b16 %v106, %v105
    %v121 = vpack.c.b16 %v108, %v107
    %v122 = vpack.c.b16 %v110, %v109
    %v123 = vpack.c.b16 %v112, %v111
    %v124 = vpack.c.b16 %v114, %v113
    %v125 = vpack.c.b16 %v116, %v115
    %v126 = vpack.c.b16 %v118, %v117
    %135 = vmatprep.subr.bf16.mxu0 0
    %136 = vmatpush1.bf16.msra.mxu0 %v119
    %137 = vmatprep.subr.bf16.mxu0 0
    %138 = vmatpush1.bf16.msra.mxu0 %v120
    %139 = vmatprep.subr.bf16.mxu0 0
    %140 = vmatpush1.bf16.msra.mxu0 %v121
    %141 = vmatprep.subr.bf16.mxu0 0
    %142 = vmatpush1.bf16.msra.mxu0 %v122
    %143 = vmatprep.subr.bf16.mxu0 0
    %144 = vmatpush1.bf16.msra.mxu0 %v123
    %145 = vmatprep.subr.bf16.mxu0 0
    %146 = vmatpush1.bf16.msra.mxu0 %v124
    %147 = vmatprep.subr.bf16.mxu0 0
    %148 = vmatpush1.bf16.msra.mxu0 %v125
    %149 = vmatprep.subr.bf16.mxu0 0
    %150 = vmatpush1.bf16.msra.mxu0 %v126
    %151 = vmatprep.subr.bf16.mxu0 0
    %152 = vmatpush1.bf16.msra.mxu0 0
    %153 = vmatprep.subr.bf16.mxu0 0
    %154 = vmatpush1.bf16.msra.mxu0 0
    %155 = vmatprep.subr.bf16.mxu0 0
    %156 = vmatpush1.bf16.msra.mxu0 0
    %157 = vmatprep.subr.bf16.mxu0 0
    %158 = vmatpush1.bf16.msra.mxu0 0
    %159 = vmatprep.subr.bf16.mxu0 0
    %160 = vmatpush1.bf16.msra.mxu0 0
    %161 = vmatprep.subr.bf16.mxu0 0
    %162 = vmatpush1.bf16.msra.mxu0 0
    %163 = vmatprep.subr.bf16.mxu0 0
    %164 = vmatpush1.bf16.msra.mxu0 0
    %165 = vmatprep.subr.bf16.mxu0 0
    %166 = vmatpush1.bf16.msra.mxu0 0
    %167 = vmatprep.mubr.bf16.mxu0 0
    %168 = vmatmul.mubr.bf16.gmra.mrb[0].mxu0 %v65
    %v169 = vpop.f32.mrb[0].mxu0
    %v170 = vadd.f32 %v86, %v169
    %v171 = vpop.f32.mrb[0].mxu0
    %v172 = vpop.f32.mrb[0].mxu0
    %v173 = vadd.f32 %v86, %v172
    %v174 = vpop.f32.mrb[0].mxu0
    %175 = vdwg.mxu0
    %v176 = vmax.f32 %v170, 0.0
    %v177 = vmax.f32 %v173, 0.0
    %v178 = vpack.c.bf16 %v177, %v176
    %s179 = scalar_lea.vmem [#allocation5], 64
    %v180 = vld [vmem:[%s179] sm:$0xf]
    %v181 = vld [vmem:[%s179 + $0x4] sm:$0xf]
    %v182 = vld [vmem:[%s179 + $0x8] sm:$0xf]
    %v183 = vld [vmem:[%s179 + $0xc] sm:$0xf]
    %v184 = vld [vmem:[%s179 + $0x10] sm:$0xf]
    %v185 = vld [vmem:[%s179 + $0x14] sm:$0xf]
    %v186 = vld [vmem:[%s179 + $0x18] sm:$0xf]
    %v187 = vld [vmem:[%s179 + $0x1c] sm:$0xf]
    %v188 = vld [vmem:[%s179 + $0x20] sm:$0xf]
    %v189 = vld [vmem:[%s179 + $0x24] sm:$0xf]
    %v190 = vld [vmem:[%s179 + $0x28] sm:$0xf]
    %v191 = vld [vmem:[%s179 + $0x2c] sm:$0xf]
    %v192 = vld [vmem:[%s179 + $0x30] sm:$0xf]
    %v193 = vld [vmem:[%s179 + $0x34] sm:$0xf]
    %v194 = vld [vmem:[%s179 + $0x38] sm:$0xf]
    %v195 = vld [vmem:[%s179 + $0x3c] sm:$0xf]
    %v196 = vld [vmem:[#allocation7 + $0x1] sm:$0x1]
    %v197 = vlaneseq
    %v198 = vshrl.u32 %v197, 7
    %v199 = vsub.s32 0, %v198
    %v200 = vrot.slane %v196, %v199
    %v217 = vunpack.c.l.b16 %v180
    %v218 = vunpack.c.l.b16 %v181
    %v219 = vunpack.c.l.b16 %v182
    %v220 = vunpack.c.l.b16 %v183
    %v221 = vunpack.c.l.b16 %v184
    %v222 = vunpack.c.l.b16 %v185
    %v223 = vunpack.c.l.b16 %v186
    %v224 = vunpack.c.l.b16 %v187
    %v225 = vunpack.c.l.b16 %v188
    %v226 = vunpack.c.l.b16 %v189
    %v227 = vunpack.c.l.b16 %v190
    %v228 = vunpack.c.l.b16 %v191
    %v229 = vunpack.c.l.b16 %v192
    %v230 = vunpack.c.l.b16 %v193
    %v231 = vunpack.c.l.b16 %v194
    %v232 = vunpack.c.l.b16 %v195
    %v233 = vpack.c.b16 %v218, %v217
    %v234 = vpack.c.b16 %v220, %v219
    %v235 = vpack.c.b16 %v222, %v221
    %v236 = vpack.c.b16 %v224, %v223
    %v237 = vpack.c.b16 %v226, %v225
    %v238 = vpack.c.b16 %v228, %v227
    %v239 = vpack.c.b16 %v230, %v229
    %v240 = vpack.c.b16 %v232, %v231
    %249 = vmatprep.subr.bf16.mxu0 0
    %250 = vmatpush1.bf16.msra.mxu0 %v233
    %251 = vmatprep.subr.bf16.mxu0 0
    %252 = vmatpush1.bf16.msra.mxu0 %v234
    %253 = vmatprep.subr.bf16.mxu0 0
    %254 = vmatpush1.bf16.msra.mxu0 %v235
    %255 = vmatprep.subr.bf16.mxu0 0
    %256 = vmatpush1.bf16.msra.mxu0 %v236
    %257 = vmatprep.subr.bf16.mxu0 0
    %258 = vmatpush1.bf16.msra.mxu0 %v237
    %259 = vmatprep.subr.bf16.mxu0 0
    %260 = vmatpush1.bf16.msra.mxu0 %v238
    %261 = vmatprep.subr.bf16.mxu0 0
    %262 = vmatpush1.bf16.msra.mxu0 %v239
    %263 = vmatprep.subr.bf16.mxu0 0
    %264 = vmatpush1.bf16.msra.mxu0 %v240
    %265 = vmatprep.subr.bf16.mxu0 0
    %266 = vmatpush1.bf16.msra.mxu0 0
    %267 = vmatprep.subr.bf16.mxu0 0
    %268 = vmatpush1.bf16.msra.mxu0 0
    %269 = vmatprep.subr.bf16.mxu0 0
    %270 = vmatpush1.bf16.msra.mxu0 0
    %271 = vmatprep.subr.bf16.mxu0 0
    %272 = vmatpush1.bf16.msra.mxu0 0
    %273 = vmatprep.subr.bf16.mxu0 0
    %274 = vmatpush1.bf16.msra.mxu0 0
    %275 = vmatprep.subr.bf16.mxu0 0
    %276 = vmatpush1.bf16.msra.mxu0 0
    %277 = vmatprep.subr.bf16.mxu0 0
    %278 = vmatpush1.bf16.msra.mxu0 0
    %279 = vmatprep.subr.bf16.mxu0 0
    %280 = vmatpush1.bf16.msra.mxu0 0
    %281 = vmatprep.mubr.bf16.mxu0 0
    %282 = vmatmul.mubr.bf16.gmra.mrb[0].mxu0 %v178
    %v283 = vpop.f32.mrb[0].mxu0
    %v284 = vadd.f32 %v200, %v283
    %v285 = vpop.f32.mrb[0].mxu0
    %v286 = vpop.f32.mrb[0].mxu0
    %v287 = vadd.f32 %v200, %v286
    %v288 = vpop.f32.mrb[0].mxu0
    %289 = vdwg.mxu0
    %v290 = vmax.f32 %v284, 0.0
    %v291 = vmax.f32 %v287, 0.0
    %v292 = vpack.c.bf16 %v291, %v290
    %s293 = scalar_lea.vmem [#allocation5], 128
    %v294 = vld [vmem:[%s293] sm:$0xf]
    %v295 = vld [vmem:[%s293 + $0x4] sm:$0xf]
    %v296 = vld [vmem:[%s293 + $0x8] sm:$0xf]
    %v297 = vld [vmem:[%s293 + $0xc] sm:$0xf]
    %v298 = vld [vmem:[%s293 + $0x10] sm:$0xf]
    %v299 = vld [vmem:[%s293 + $0x14] sm:$0xf]
    %v300 = vld [vmem:[%s293 + $0x18] sm:$0xf]
    %v301 = vld [vmem:[%s293 + $0x1c] sm:$0xf]
    %v302 = vld [vmem:[%s293 + $0x20] sm:$0xf]
    %v303 = vld [vmem:[%s293 + $0x24] sm:$0xf]
    %v304 = vld [vmem:[%s293 + $0x28] sm:$0xf]
    %v305 = vld [vmem:[%s293 + $0x2c] sm:$0xf]
    %v306 = vld [vmem:[%s293 + $0x30] sm:$0xf]
    %v307 = vld [vmem:[%s293 + $0x34] sm:$0xf]
    %v308 = vld [vmem:[%s293 + $0x38] sm:$0xf]
    %v309 = vld [vmem:[%s293 + $0x3c] sm:$0xf]
    %v310 = vld [vmem:[#allocation7 + $0x2] sm:$0x1]
    %v311 = vlaneseq
    %v312 = vshrl.u32 %v311, 7
    %v313 = vsub.s32 0, %v312
    %v314 = vrot.slane %v310, %v313
    %v331 = vunpack.c.l.b16 %v294
    %v332 = vunpack.c.l.b16 %v295
    %v333 = vunpack.c.l.b16 %v296
    %v334 = vunpack.c.l.b16 %v297
    %v335 = vunpack.c.l.b16 %v298
    %v336 = vunpack.c.l.b16 %v299
    %v337 = vunpack.c.l.b16 %v300
    %v338 = vunpack.c.l.b16 %v301
    %v339 = vunpack.c.l.b16 %v302
    %v340 = vunpack.c.l.b16 %v303
    %v341 = vunpack.c.l.b16 %v304
    %v342 = vunpack.c.l.b16 %v305
    %v343 = vunpack.c.l.b16 %v306
    %v344 = vunpack.c.l.b16 %v307
    %v345 = vunpack.c.l.b16 %v308
    %v346 = vunpack.c.l.b16 %v309
    %v347 = vpack.c.b16 %v332, %v331
    %v348 = vpack.c.b16 %v334, %v333
    %v349 = vpack.c.b16 %v336, %v335
    %v350 = vpack.c.b16 %v338, %v337
    %v351 = vpack.c.b16 %v340, %v339
    %v352 = vpack.c.b16 %v342, %v341
    %v353 = vpack.c.b16 %v344, %v343
    %v354 = vpack.c.b16 %v346, %v345
    %363 = vmatprep.subr.bf16.mxu0 0
    %364 = vmatpush1.bf16.msra.mxu0 %v347
    %365 = vmatprep.subr.bf16.mxu0 0
    %366 = vmatpush1.bf16.msra.mxu0 %v348
    %367 = vmatprep.subr.bf16.mxu0 0
    %368 = vmatpush1.bf16.msra.mxu0 %v349
    %369 = vmatprep.subr.bf16.mxu0 0
    %370 = vmatpush1.bf16.msra.mxu0 %v350
    %371 = vmatprep.subr.bf16.mxu0 0
    %372 = vmatpush1.bf16.msra.mxu0 %v351
    %373 = vmatprep.subr.bf16.mxu0 0
    %374 = vmatpush1.bf16.msra.mxu0 %v352
    %375 = vmatprep.subr.bf16.mxu0 0
    %376 = vmatpush1.bf16.msra.mxu0 %v353
    %377 = vmatprep.subr.bf16.mxu0 0
    %378 = vmatpush1.bf16.msra.mxu0 %v354
    %379 = vmatprep.subr.bf16.mxu0 0
    %380 = vmatpush1.bf16.msra.mxu0 0
    %381 = vmatprep.subr.bf16.mxu0 0
    %382 = vmatpush1.bf16.msra.mxu0 0
    %383 = vmatprep.subr.bf16.mxu0 0
    %384 = vmatpush1.bf16.msra.mxu0 0
    %385 = vmatprep.subr.bf16.mxu0 0
    %386 = vmatpush1.bf16.msra.mxu0 0
    %387 = vmatprep.subr.bf16.mxu0 0
    %388 = vmatpush1.bf16.msra.mxu0 0
    %389 = vmatprep.subr.bf16.mxu0 0
    %390 = vmatpush1.bf16.msra.mxu0 0
    %391 = vmatprep.subr.bf16.mxu0 0
    %392 = vmatpush1.bf16.msra.mxu0 0
    %393 = vmatprep.subr.bf16.mxu0 0
    %394 = vmatpush1.bf16.msra.mxu0 0
    %395 = vmatprep.mubr.bf16.mxu0 0
    %396 = vmatmul.mubr.bf16.gmra.mrb[0].mxu0 %v292
    %v397 = vpop.f32.mrb[0].mxu0
    %v398 = vadd.f32 %v314, %v397
    %v399 = vpop.f32.mrb[0].mxu0
    %v400 = vpop.f32.mrb[0].mxu0
    %v401 = vadd.f32 %v314, %v400
    %v402 = vpop.f32.mrb[0].mxu0
    %403 = vdwg.mxu0
    %v404 = vmax.f32 %v398, 0.0
    %v405 = vmax.f32 %v401, 0.0
    %v406 = vpack.c.bf16 %v405, %v404
    %s407 = scalar_lea.vmem [#allocation5], 192
    %v408 = vld [vmem:[%s407] sm:$0xf]
    %v409 = vld [vmem:[%s407 + $0x4] sm:$0xf]
    %v410 = vld [vmem:[%s407 + $0x8] sm:$0xf]
    %v411 = vld [vmem:[%s407 + $0xc] sm:$0xf]
    %v412 = vld [vmem:[%s407 + $0x10] sm:$0xf]
    %v413 = vld [vmem:[%s407 + $0x14] sm:$0xf]
    %v414 = vld [vmem:[%s407 + $0x18] sm:$0xf]
    %v415 = vld [vmem:[%s407 + $0x1c] sm:$0xf]
    %v416 = vld [vmem:[%s407 + $0x20] sm:$0xf]
    %v417 = vld [vmem:[%s407 + $0x24] sm:$0xf]
    %v418 = vld [vmem:[%s407 + $0x28] sm:$0xf]
    %v419 = vld [vmem:[%s407 + $0x2c] sm:$0xf]
    %v420 = vld [vmem:[%s407 + $0x30] sm:$0xf]
    %v421 = vld [vmem:[%s407 + $0x34] sm:$0xf]
    %v422 = vld [vmem:[%s407 + $0x38] sm:$0xf]
    %v423 = vld [vmem:[%s407 + $0x3c] sm:$0xf]
    %v424 = vld [vmem:[#allocation7 + $0x3] sm:$0x1]
    %v425 = vlaneseq
    %v426 = vshrl.u32 %v425, 7
    %v427 = vsub.s32 0, %v426
    %v428 = vrot.slane %v424, %v427
    %v445 = vunpack.c.l.b16 %v408
    %v446 = vunpack.c.l.b16 %v409
    %v447 = vunpack.c.l.b16 %v410
    %v448 = vunpack.c.l.b16 %v411
    %v449 = vunpack.c.l.b16 %v412
    %v450 = vunpack.c.l.b16 %v413
    %v451 = vunpack.c.l.b16 %v414
    %v452 = vunpack.c.l.b16 %v415
    %v453 = vunpack.c.l.b16 %v416
    %v454 = vunpack.c.l.b16 %v417
    %v455 = vunpack.c.l.b16 %v418
    %v456 = vunpack.c.l.b16 %v419
    %v457 = vunpack.c.l.b16 %v420
    %v458 = vunpack.c.l.b16 %v421
    %v459 = vunpack.c.l.b16 %v422
    %v460 = vunpack.c.l.b16 %v423
    %v461 = vpack.c.b16 %v446, %v445
    %v462 = vpack.c.b16 %v448, %v447
    %v463 = vpack.c.b16 %v450, %v449
    %v464 = vpack.c.b16 %v452, %v451
    %v465 = vpack.c.b16 %v454, %v453
    %v466 = vpack.c.b16 %v456, %v455
    %v467 = vpack.c.b16 %v458, %v457
    %v468 = vpack.c.b16 %v460, %v459
    %477 = vmatprep.subr.bf16.mxu0 0
    %478 = vmatpush1.bf16.msra.mxu0 %v461
    %479 = vmatprep.subr.bf16.mxu0 0
    %480 = vmatpush1.bf16.msra.mxu0 %v462
    %481 = vmatprep.subr.bf16.mxu0 0
    %482 = vmatpush1.bf16.msra.mxu0 %v463
    %483 = vmatprep.subr.bf16.mxu0 0
    %484 = vmatpush1.bf16.msra.mxu0 %v464
    %485 = vmatprep.subr.bf16.mxu0 0
    %486 = vmatpush1.bf16.msra.mxu0 %v465
    %487 = vmatprep.subr.bf16.mxu0 0
    %488 = vmatpush1.bf16.msra.mxu0 %v466
    %489 = vmatprep.subr.bf16.mxu0 0
    %490 = vmatpush1.bf16.msra.mxu0 %v467
    %491 = vmatprep.subr.bf16.mxu0 0
    %492 = vmatpush1.bf16.msra.mxu0 %v468
    %493 = vmatprep.subr.bf16.mxu0 0
    %494 = vmatpush1.bf16.msra.mxu0 0
    %495 = vmatprep.subr.bf16.mxu0 0
    %496 = vmatpush1.bf16.msra.mxu0 0
    %497 = vmatprep.subr.bf16.mxu0 0
    %498 = vmatpush1.bf16.msra.mxu0 0
    %499 = vmatprep.subr.bf16.mxu0 0
    %500 = vmatpush1.bf16.msra.mxu0 0
    %501 = vmatprep.subr.bf16.mxu0 0
    %502 = vmatpush1.bf16.msra.mxu0 0
    %503 = vmatprep.subr.bf16.mxu0 0
    %504 = vmatpush1.bf16.msra.mxu0 0
    %505 = vmatprep.subr.bf16.mxu0 0
    %506 = vmatpush1.bf16.msra.mxu0 0
    %507 = vmatprep.subr.bf16.mxu0 0
    %508 = vmatpush1.bf16.msra.mxu0 0
    %509 = vmatprep.mubr.bf16.mxu0 0
    %510 = vmatmul.mubr.bf16.gmra.mrb[0].mxu0 %v406
    %v511 = vpop.f32.mrb[0].mxu0
    %v512 = vadd.f32 %v428, %v511
    %v513 = vpop.f32.mrb[0].mxu0
    %v514 = vpop.f32.mrb[0].mxu0
    %v515 = vadd.f32 %v428, %v514
    %v516 = vpop.f32.mrb[0].mxu0
    %517 = vdwg.mxu0
    %v518 = vmax.f32 %v512, 0.0
    %v519 = vmax.f32 %v515, 0.0
    %v520 = vpack.c.bf16 %v519, %v518
    %s521 = scalar_lea.vmem [#allocation5], 256
    %v522 = vld [vmem:[%s521] sm:$0xf]
    %v523 = vld [vmem:[%s521 + $0x4] sm:$0xf]
    %v524 = vld [vmem:[%s521 + $0x8] sm:$0xf]
    %v525 = vld [vmem:[%s521 + $0xc] sm:$0xf]
    %v526 = vld [vmem:[%s521 + $0x10] sm:$0xf]
    %v527 = vld [vmem:[%s521 + $0x14] sm:$0xf]
    %v528 = vld [vmem:[%s521 + $0x18] sm:$0xf]
    %v529 = vld [vmem:[%s521 + $0x1c] sm:$0xf]
    %v530 = vld [vmem:[%s521 + $0x20] sm:$0xf]
    %v531 = vld [vmem:[%s521 + $0x24] sm:$0xf]
    %v532 = vld [vmem:[%s521 + $0x28] sm:$0xf]
    %v533 = vld [vmem:[%s521 + $0x2c] sm:$0xf]
    %v534 = vld [vmem:[%s521 + $0x30] sm:$0xf]
    %v535 = vld [vmem:[%s521 + $0x34] sm:$0xf]
    %v536 = vld [vmem:[%s521 + $0x38] sm:$0xf]
    %v537 = vld [vmem:[%s521 + $0x3c] sm:$0xf]
    %v538 = vld [vmem:[#allocation7 + $0x4] sm:$0x1]
    %v539 = vlaneseq
    %v540 = vshrl.u32 %v539, 7
    %v541 = vsub.s32 0, %v540
    %v542 = vrot.slane %v538, %v541
    %v559 = vunpack.c.l.b16 %v522
    %v560 = vunpack.c.l.b16 %v523
    %v561 = vunpack.c.l.b16 %v524
    %v562 = vunpack.c.l.b16 %v525
    %v563 = vunpack.c.l.b16 %v526
    %v564 = vunpack.c.l.b16 %v527
    %v565 = vunpack.c.l.b16 %v528
    %v566 = vunpack.c.l.b16 %v529
    %v567 = vunpack.c.l.b16 %v530
    %v568 = vunpack.c.l.b16 %v531
    %v569 = vunpack.c.l.b16 %v532
    %v570 = vunpack.c.l.b16 %v533
    %v571 = vunpack.c.l.b16 %v534
    %v572 = vunpack.c.l.b16 %v535
    %v573 = vunpack.c.l.b16 %v536
    %v574 = vunpack.c.l.b16 %v537
    %v575 = vpack.c.b16 %v560, %v559
    %v576 = vpack.c.b16 %v562, %v561
    %v577 = vpack.c.b16 %v564, %v563
    %v578 = vpack.c.b16 %v566, %v565
    %v579 = vpack.c.b16 %v568, %v567
    %v580 = vpack.c.b16 %v570, %v569
    %v581 = vpack.c.b16 %v572, %v571
    %v582 = vpack.c.b16 %v574, %v573
    %591 = vmatprep.subr.bf16.mxu0 0
    %592 = vmatpush1.bf16.msra.mxu0 %v575
    %593 = vmatprep.subr.bf16.mxu0 0
    %594 = vmatpush1.bf16.msra.mxu0 %v576
    %595 = vmatprep.subr.bf16.mxu0 0
    %596 = vmatpush1.bf16.msra.mxu0 %v577
    %597 = vmatprep.subr.bf16.mxu0 0
    %598 = vmatpush1.bf16.msra.mxu0 %v578
    %599 = vmatprep.subr.bf16.mxu0 0
    %600 = vmatpush1.bf16.msra.mxu0 %v579
    %601 = vmatprep.subr.bf16.mxu0 0
    %602 = vmatpush1.bf16.msra.mxu0 %v580
    %603 = vmatprep.subr.bf16.mxu0 0
    %604 = vmatpush1.bf16.msra.mxu0 %v581
    %605 = vmatprep.subr.bf16.mxu0 0
    %606 = vmatpush1.bf16.msra.mxu0 %v582
    %607 = vmatprep.subr.bf16.mxu0 0
    %608 = vmatpush1.bf16.msra.mxu0 0
    %609 = vmatprep.subr.bf16.mxu0 0
    %610 = vmatpush1.bf16.msra.mxu0 0
    %611 = vmatprep.subr.bf16.mxu0 0
    %612 = vmatpush1.bf16.msra.mxu0 0
    %613 = vmatprep.subr.bf16.mxu0 0
    %614 = vmatpush1.bf16.msra.mxu0 0
    %615 = vmatprep.subr.bf16.mxu0 0
    %616 = vmatpush1.bf16.msra.mxu0 0
    %617 = vmatprep.subr.bf16.mxu0 0
    %618 = vmatpush1.bf16.msra.mxu0 0
    %619 = vmatprep.subr.bf16.mxu0 0
    %620 = vmatpush1.bf16.msra.mxu0 0
    %621 = vmatprep.subr.bf16.mxu0 0
    %622 = vmatpush1.bf16.msra.mxu0 0
    %623 = vmatprep.mubr.bf16.mxu0 0
    %624 = vmatmul.mubr.bf16.gmra.mrb[0].mxu0 %v520
    %v625 = vpop.f32.mrb[0].mxu0
    %v626 = vadd.f32 %v542, %v625
    %v627 = vpop.f32.mrb[0].mxu0
    %v628 = vpop.f32.mrb[0].mxu0
    %v629 = vadd.f32 %v542, %v628
    %v630 = vpop.f32.mrb[0].mxu0
    %631 = vdwg.mxu0
    %vm632 = vcmask 31744
    %633 = vst.msk [vmem:[%s3] sm:$0xff] %vm632, %v626
    %634 = vst.msk [vmem:[%s3 + $0x8] sm:$0xff] %vm632, %v629
    // Predicated region
    $region26: #{tpu_custom_call.1} parent=1 // pred_check
      _
    $region27: #{tpu_custom_call.1} parent=1 // pred_check_branch
      %636 = sbr.rel (0) target = $region29
    $region28: #{tpu_custom_call.1} parent=1 // pred_region
      _
    $region29: #{tpu_custom_call.1} parent=1 // pred_fallthru
      _
    // Predicated region
    $region30: #{tpu_custom_call.1} parent=1 // pred_check
      _
    $region31: #{tpu_custom_call.1} parent=1 // pred_check_branch
      %638 = sbr.rel (0) target = $region33
    $region32: #{tpu_custom_call.1} parent=1 // pred_region
      _
    $region33: #{tpu_custom_call.1} parent=1 // pred_fallthru
      _
    %639 = vsyncpa [#allocation4], 1
    %640 = vsyncpa [#allocation6], 1

</llo_original>
